<compile_context>
chip_gen: v7x
topology: tpu7x:2x2x1
jax: 0.10.0
libtpu: 0.0.40
codegen_flags: <defaults>
</compile_context>

<pallas_src>
import jax
import jax.numpy as jnp
from jax.experimental import pallas as pl
from jax.experimental.pallas import tpu as pltpu


def _make_sa_kernel(C, H, W):
    HW = H * W
    w_is_pow2 = (W & (W - 1)) == 0

    def sa_kernel(w_ref, x_ref, o_ref):
        # w_ref : SMEM (19,) f32 = Conv2d(2,1,3,3) weight (c,kh,kw)-flattened + bias
        # x_ref : VMEM (Bt, C, HW)   lane-dense view of (Bt, C, H, W)
        # o_ref : VMEM (Bt, C, HW)
        Bt = x_ref.shape[0]

        # ---- fused channel max + channel sum (single pass over C, f32 acc) ----
        # Per-channel ref slices: each channel is loaded on demand instead of
        # materializing the whole block as one value.
        x0 = x_ref[:, 0, :].astype(jnp.float32)              # (Bt, HW)
        c_max = x0
        c_sum = x0
        for c in range(1, C):
            xc = x_ref[:, c, :].astype(jnp.float32)
            c_max = jnp.maximum(c_max, xc)
            c_sum = c_sum + xc
        c_mean = c_sum * (1.0 / C)

        # ---- 3x3 conv, padding=1, on the flattened spatial axis --------------
        # Flat index p = i*W + j; neighbours are rolls by +-1 (columns) and
        # +-W (rows); wrapped / out-of-image source positions are zeroed.
        p = jax.lax.broadcasted_iota(jnp.int32, (1, HW), 1)
        col = (p & (W - 1)) if w_is_pow2 else (p % W)
        ok_l = col >= 1                 # column j-1 exists  (dj = -1)
        ok_r = col <= W - 2             # column j+1 exists  (dj = +1)
        ok_u = p >= W                   # row    i-1 exists  (di = -1)
        ok_d = p < (H - 1) * W          # row    i+1 exists  (di = +1)

        def shift(f, delta, mask):
            # s[..., q] = f[..., q + delta], zeroed where the source is OOB.
            s = pltpu.roll(f, shift=(-delta) % HW, axis=1)
            return jnp.where(mask, s, 0.0)

        feats = (c_max, c_mean)
        # Hoisted column-shifted copies: 4 rolls total (2 per feature).
        csh = [(shift(f, -1, ok_l), f, shift(f, +1, ok_r)) for f in feats]

        acc = jnp.full((Bt, HW), w_ref[18], dtype=jnp.float32)        # bias
        for di in (-1, 0, 1):
            g = None
            for ci in range(2):
                for dj in (-1, 0, 1):
                    w = w_ref[ci * 9 + (di + 1) * 3 + (dj + 1)]
                    t = w * csh[ci][dj + 1]
                    g = t if g is None else g + t
            if di == 0:
                acc = acc + g
            else:
                # 1 row-roll per nonzero di (2 total), applied after summing
                # both features / all column offsets for that row offset.
                acc = acc + shift(g, di * W, ok_u if di < 0 else ok_d)

        att = jax.nn.sigmoid(acc).astype(o_ref.dtype)                 # (Bt, HW)

        # ---- apply: stream per channel (dense lanes, no materialized broadcast)
        for c in range(C):
            o_ref[:, c, :] = x_ref[:, c, :] * att

    return sa_kernel


def sa_layer(x, conv_w, conv_b, *, donate_x=False):
    """x: (B, C, H, W); conv_w: (1, 2, 3, 3); conv_b: (1,)."""
    B, C, H, W = x.shape
    HW = H * W
    itemsize = x.dtype.itemsize
    wflat = jnp.concatenate(
        [conv_w.reshape(-1), conv_b.reshape(-1)]).astype(jnp.float32)   # (19,)

    # Lane-dense view: last dim H*W maps to lanes (multiple of 128 for
    # realistic spatial sizes); channels map to sublanes.
    x3 = x.reshape(B, C, HW)

    # ---- generation-aware per-step budget ---------------------------------
    try:
        vmem_cap = int(pltpu.get_tpu_info().vmem_capacity_bytes)
    except Exception:
        vmem_cap = 64 * 1024 * 1024          # conservative (v7x per-TC) fallback
    # Per-step (in + out) tile target ~1-4 MiB: big enough to amortize the
    # ~0.35us per-step cost, small enough that double-buffered in+out stays
    # comfortably inside every generation's scoped-VMEM limit.
    tile_budget = max(1 << 20, min(4 << 20, vmem_cap // 16))
    vmem_limit = int(min(vmem_cap // 2, max(32 << 20, 4 * tile_budget)))

    # ---- batch-tile selection: keep the pipeline (and v7x megacore) fed ----
    per_b = 2 * C * HW * itemsize            # in + out bytes per batch element
    bt_budget = max(1, tile_budget // max(per_b, 1))
    target_steps = min(B, 8)                 # >=8 steps when possible, >=2 otherwise
    bt_steps = max(1, B // target_steps)
    bt = int(min(B, bt_budget, bt_steps))
    while B % bt:
        bt -= 1
    # TODO(synk): if per_b alone exceeds tile_budget (huge C*H*W), switch to an
    # H-tiled single-pass kernel with a 1-row halo instead of bt=1.

    grid_spec = pltpu.PrefetchScalarGridSpec(
        num_scalar_prefetch=1,               # conv weights + bias -> SMEM
        grid=(B // bt,),
        in_specs=[pl.BlockSpec((bt, C, HW), lambda b, w: (b, 0, 0))],
        out_specs=pl.BlockSpec((bt, C, HW), lambda b, w: (b, 0, 0)),
    )
    cost = pl.CostEstimate(
        flops=int(B * HW * (2 * C + 36)),     # reductions + 2x(3x3) stencil + apply
        transcendentals=int(B * HW),          # sigmoid
        bytes_accessed=int(2 * B * C * HW * itemsize),
    )
    out = pl.pallas_call(
        _make_sa_kernel(C, H, W),
        out_shape=jax.ShapeDtypeStruct((B, C, HW), x.dtype),
        grid_spec=grid_spec,
        compiler_params=pltpu.CompilerParams(
            dimension_semantics=("parallel",),
            vmem_limit_bytes=vmem_limit),
        cost_estimate=cost,
        # Production path: donate x to drop the extra HBM output buffer.  Off
        # by default so x stays live (reference check here, residual paths in
        # MIRNet).  Operand index 1 = x3 (index 0 is the scalar-prefetch wflat).
        input_output_aliases=({1: 0} if donate_x else {}),
    )(wflat, x3)
    return out.reshape(B, C, H, W)


def sa_layer_ref(x, conv_w, conv_b):
    """Pure-JAX reference of the PyTorch forward."""
    c_max = jnp.max(x, axis=1, keepdims=True)
    c_mean = jnp.mean(x, axis=1, keepdims=True)
    feat = jnp.concatenate([c_max, c_mean], axis=1)          # (B, 2, H, W)
    conv = jax.lax.conv_general_dilated(
        feat, conv_w, window_strides=(1, 1), padding="SAME",
        dimension_numbers=("NCHW", "OIHW", "NCHW"))
    conv = conv + conv_b.reshape(1, -1, 1, 1)
    return x * jax.nn.sigmoid(conv)


if __name__ == "__main__":
    key = jax.random.PRNGKey(0)
    kx, kw, kb = jax.random.split(key, 3)

    B, C, H, W = 2, 4, 16, 16
    x = jax.random.normal(kx, (B, C, H, W), dtype=jnp.float32)
    # Deterministic synthetic Conv2d(2, 1, 3) parameters.
    conv_w = jax.random.normal(kw, (1, 2, 3, 3), dtype=jnp.float32) * 0.1
    conv_b = jax.random.normal(kb, (1,), dtype=jnp.float32) * 0.1

    out = jax.block_until_ready(sa_layer(x, conv_w, conv_b))
    ref = jax.block_until_ready(sa_layer_ref(x, conv_w, conv_b))

    assert out.shape == (B, C, H, W)
    assert jnp.allclose(out, ref, atol=1e-5, rtol=1e-5), "mismatch vs reference"
    print("KERNEL_OK")
</pallas_src>

<mosaic_0001>
module attributes {stable_mosaic.version = 11 : i64} {
  func.func @sa_kernel(%arg0: i32, %arg1: memref<19xf32, #tpu.memory_space<smem>>, %arg2: memref<1x4x256xf32, #tpu.memory_space<vmem>>, %arg3: memref<1x4x256xf32, #tpu.memory_space<vmem>>) attributes {dimension_semantics = [#tpu.dimension_semantics<parallel>], iteration_bounds = array<i64: 2>, scalar_prefetch = 1 : i64, scratch_operands = 0 : i64, tpu.core_type = #tpu.core_type<tc>, window_params = [{transform_indices = @transform_0, window_bounds = array<i64: 1, 4, 256>}, {transform_indices = @transform_1, window_bounds = array<i64: 1, 4, 256>}]} {
    %c0 = arith.constant 0 : index
    %c0_0 = arith.constant 0 : index
    %c0_1 = arith.constant 0 : index
    %0 = vector.load %arg2[%c0, %c0_0, %c0_1] : memref<1x4x256xf32, #tpu.memory_space<vmem>>, vector<1x1x256xf32>
    %1 = vector.shape_cast %0 : vector<1x1x256xf32> to vector<1x256xf32>
    %c0_2 = arith.constant 0 : index
    %c1 = arith.constant 1 : index
    %c0_3 = arith.constant 0 : index
    %2 = vector.load %arg2[%c0_2, %c1, %c0_3] : memref<1x4x256xf32, #tpu.memory_space<vmem>>, vector<1x1x256xf32>
    %3 = vector.shape_cast %2 : vector<1x1x256xf32> to vector<1x256xf32>
    %4 = arith.maximumf %1, %3 : vector<1x256xf32>
    %5 = arith.addf %1, %3 : vector<1x256xf32>
    %c0_4 = arith.constant 0 : index
    %c2 = arith.constant 2 : index
    %c0_5 = arith.constant 0 : index
    %6 = vector.load %arg2[%c0_4, %c2, %c0_5] : memref<1x4x256xf32, #tpu.memory_space<vmem>>, vector<1x1x256xf32>
    %7 = vector.shape_cast %6 : vector<1x1x256xf32> to vector<1x256xf32>
    %8 = arith.maximumf %4, %7 : vector<1x256xf32>
    %9 = arith.addf %5, %7 : vector<1x256xf32>
    %c0_6 = arith.constant 0 : index
    %c3 = arith.constant 3 : index
    %c0_7 = arith.constant 0 : index
    %10 = vector.load %arg2[%c0_6, %c3, %c0_7] : memref<1x4x256xf32, #tpu.memory_space<vmem>>, vector<1x1x256xf32>
    %11 = vector.shape_cast %10 : vector<1x1x256xf32> to vector<1x256xf32>
    %12 = arith.maximumf %8, %11 : vector<1x256xf32>
    %13 = arith.addf %9, %11 : vector<1x256xf32>
    %cst = arith.constant 2.500000e-01 : f32
    %14 = vector.broadcast %cst : f32 to vector<1x256xf32>
    %15 = arith.mulf %13, %14 : vector<1x256xf32>
    %16 = tpu.iota {dimensions = array<i32: 1>} : vector<1x256xi32>
    %c15_i32 = arith.constant 15 : i32
    %17 = vector.broadcast %c15_i32 : i32 to vector<1x256xi32>
    %18 = arith.andi %16, %17 : vector<1x256xi32>
    %c1_i32 = arith.constant 1 : i32
    %19 = vector.broadcast %c1_i32 : i32 to vector<1x256xi32>
    %20 = arith.cmpi sge, %18, %19 : vector<1x256xi32>
    %c14_i32 = arith.constant 14 : i32
    %21 = vector.broadcast %c14_i32 : i32 to vector<1x256xi32>
    %22 = arith.cmpi sle, %18, %21 : vector<1x256xi32>
    %c16_i32 = arith.constant 16 : i32
    %23 = vector.broadcast %c16_i32 : i32 to vector<1x256xi32>
    %24 = arith.cmpi sge, %16, %23 : vector<1x256xi32>
    %c240_i32 = arith.constant 240 : i32
    %25 = vector.broadcast %c240_i32 : i32 to vector<1x256xi32>
    %26 = arith.cmpi slt, %16, %25 : vector<1x256xi32>
    %c1_i32_8 = arith.constant 1 : i32
    %27 = tpu.dynamic_rotate %12 by %c1_i32_8 dim 1 : vector<1x256xf32>, i32 -> vector<1x256xf32>
    %cst_9 = arith.constant 0.000000e+00 : f32
    %28 = vector.broadcast %cst_9 : f32 to vector<1x256xf32>
    %29 = arith.select %20, %27, %28 : vector<1x256xi1>, vector<1x256xf32>
    %c255_i32 = arith.constant 255 : i32
    %30 = tpu.dynamic_rotate %12 by %c255_i32 dim 1 : vector<1x256xf32>, i32 -> vector<1x256xf32>
    %cst_10 = arith.constant 0.000000e+00 : f32
    %31 = vector.broadcast %cst_10 : f32 to vector<1x256xf32>
    %32 = arith.select %22, %30, %31 : vector<1x256xi1>, vector<1x256xf32>
    %c1_i32_11 = arith.constant 1 : i32
    %33 = tpu.dynamic_rotate %15 by %c1_i32_11 dim 1 : vector<1x256xf32>, i32 -> vector<1x256xf32>
    %cst_12 = arith.constant 0.000000e+00 : f32
    %34 = vector.broadcast %cst_12 : f32 to vector<1x256xf32>
    %35 = arith.select %20, %33, %34 : vector<1x256xi1>, vector<1x256xf32>
    %c255_i32_13 = arith.constant 255 : i32
    %36 = tpu.dynamic_rotate %15 by %c255_i32_13 dim 1 : vector<1x256xf32>, i32 -> vector<1x256xf32>
    %cst_14 = arith.constant 0.000000e+00 : f32
    %37 = vector.broadcast %cst_14 : f32 to vector<1x256xf32>
    %38 = arith.select %22, %36, %37 : vector<1x256xi1>, vector<1x256xf32>
    %c18 = arith.constant 18 : index
    %39 = memref.load %arg1[%c18] : memref<19xf32, #tpu.memory_space<smem>>
    %40 = vector.broadcast %39 : f32 to vector<1x256xf32>
    %c0_15 = arith.constant 0 : index
    %41 = memref.load %arg1[%c0_15] : memref<19xf32, #tpu.memory_space<smem>>
    %42 = vector.broadcast %41 : f32 to vector<1x256xf32>
    %43 = arith.mulf %42, %29 : vector<1x256xf32>
    %c1_16 = arith.constant 1 : index
    %44 = memref.load %arg1[%c1_16] : memref<19xf32, #tpu.memory_space<smem>>
    %45 = vector.broadcast %44 : f32 to vector<1x256xf32>
    %46 = arith.mulf %45, %12 : vector<1x256xf32>
    %47 = arith.addf %43, %46 : vector<1x256xf32>
    %c2_17 = arith.constant 2 : index
    %48 = memref.load %arg1[%c2_17] : memref<19xf32, #tpu.memory_space<smem>>
    %49 = vector.broadcast %48 : f32 to vector<1x256xf32>
    %50 = arith.mulf %49, %32 : vector<1x256xf32>
    %51 = arith.addf %47, %50 : vector<1x256xf32>
    %c9 = arith.constant 9 : index
    %52 = memref.load %arg1[%c9] : memref<19xf32, #tpu.memory_space<smem>>
    %53 = vector.broadcast %52 : f32 to vector<1x256xf32>
    %54 = arith.mulf %53, %35 : vector<1x256xf32>
    %55 = arith.addf %51, %54 : vector<1x256xf32>
    %c10 = arith.constant 10 : index
    %56 = memref.load %arg1[%c10] : memref<19xf32, #tpu.memory_space<smem>>
    %57 = vector.broadcast %56 : f32 to vector<1x256xf32>
    %58 = arith.mulf %57, %15 : vector<1x256xf32>
    %59 = arith.addf %55, %58 : vector<1x256xf32>
    %c11 = arith.constant 11 : index
    %60 = memref.load %arg1[%c11] : memref<19xf32, #tpu.memory_space<smem>>
    %61 = vector.broadcast %60 : f32 to vector<1x256xf32>
    %62 = arith.mulf %61, %38 : vector<1x256xf32>
    %63 = arith.addf %59, %62 : vector<1x256xf32>
    %c16_i32_18 = arith.constant 16 : i32
    %64 = tpu.dynamic_rotate %63 by %c16_i32_18 dim 1 : vector<1x256xf32>, i32 -> vector<1x256xf32>
    %cst_19 = arith.constant 0.000000e+00 : f32
    %65 = vector.broadcast %cst_19 : f32 to vector<1x256xf32>
    %66 = arith.select %24, %64, %65 : vector<1x256xi1>, vector<1x256xf32>
    %67 = arith.addf %40, %66 : vector<1x256xf32>
    %c3_20 = arith.constant 3 : index
    %68 = memref.load %arg1[%c3_20] : memref<19xf32, #tpu.memory_space<smem>>
    %69 = vector.broadcast %68 : f32 to vector<1x256xf32>
    %70 = arith.mulf %69, %29 : vector<1x256xf32>
    %c4 = arith.constant 4 : index
    %71 = memref.load %arg1[%c4] : memref<19xf32, #tpu.memory_space<smem>>
    %72 = vector.broadcast %71 : f32 to vector<1x256xf32>
    %73 = arith.mulf %72, %12 : vector<1x256xf32>
    %74 = arith.addf %70, %73 : vector<1x256xf32>
    %c5 = arith.constant 5 : index
    %75 = memref.load %arg1[%c5] : memref<19xf32, #tpu.memory_space<smem>>
    %76 = vector.broadcast %75 : f32 to vector<1x256xf32>
    %77 = arith.mulf %76, %32 : vector<1x256xf32>
    %78 = arith.addf %74, %77 : vector<1x256xf32>
    %c12 = arith.constant 12 : index
    %79 = memref.load %arg1[%c12] : memref<19xf32, #tpu.memory_space<smem>>
    %80 = vector.broadcast %79 : f32 to vector<1x256xf32>
    %81 = arith.mulf %80, %35 : vector<1x256xf32>
    %82 = arith.addf %78, %81 : vector<1x256xf32>
    %c13 = arith.constant 13 : index
    %83 = memref.load %arg1[%c13] : memref<19xf32, #tpu.memory_space<smem>>
    %84 = vector.broadcast %83 : f32 to vector<1x256xf32>
    %85 = arith.mulf %84, %15 : vector<1x256xf32>
    %86 = arith.addf %82, %85 : vector<1x256xf32>
    %c14 = arith.constant 14 : index
    %87 = memref.load %arg1[%c14] : memref<19xf32, #tpu.memory_space<smem>>
    %88 = vector.broadcast %87 : f32 to vector<1x256xf32>
    %89 = arith.mulf %88, %38 : vector<1x256xf32>
    %90 = arith.addf %86, %89 : vector<1x256xf32>
    %91 = arith.addf %67, %90 : vector<1x256xf32>
    %c6 = arith.constant 6 : index
    %92 = memref.load %arg1[%c6] : memref<19xf32, #tpu.memory_space<smem>>
    %93 = vector.broadcast %92 : f32 to vector<1x256xf32>
    %94 = arith.mulf %93, %29 : vector<1x256xf32>
    %c7 = arith.constant 7 : index
    %95 = memref.load %arg1[%c7] : memref<19xf32, #tpu.memory_space<smem>>
    %96 = vector.broadcast %95 : f32 to vector<1x256xf32>
    %97 = arith.mulf %96, %12 : vector<1x256xf32>
    %98 = arith.addf %94, %97 : vector<1x256xf32>
    %c8 = arith.constant 8 : index
    %99 = memref.load %arg1[%c8] : memref<19xf32, #tpu.memory_space<smem>>
    %100 = vector.broadcast %99 : f32 to vector<1x256xf32>
    %101 = arith.mulf %100, %32 : vector<1x256xf32>
    %102 = arith.addf %98, %101 : vector<1x256xf32>
    %c15 = arith.constant 15 : index
    %103 = memref.load %arg1[%c15] : memref<19xf32, #tpu.memory_space<smem>>
    %104 = vector.broadcast %103 : f32 to vector<1x256xf32>
    %105 = arith.mulf %104, %35 : vector<1x256xf32>
    %106 = arith.addf %102, %105 : vector<1x256xf32>
    %c16 = arith.constant 16 : index
    %107 = memref.load %arg1[%c16] : memref<19xf32, #tpu.memory_space<smem>>
    %108 = vector.broadcast %107 : f32 to vector<1x256xf32>
    %109 = arith.mulf %108, %15 : vector<1x256xf32>
    %110 = arith.addf %106, %109 : vector<1x256xf32>
    %c17 = arith.constant 17 : index
    %111 = memref.load %arg1[%c17] : memref<19xf32, #tpu.memory_space<smem>>
    %112 = vector.broadcast %111 : f32 to vector<1x256xf32>
    %113 = arith.mulf %112, %38 : vector<1x256xf32>
    %114 = arith.addf %110, %113 : vector<1x256xf32>
    %c240_i32_21 = arith.constant 240 : i32
    %115 = tpu.dynamic_rotate %114 by %c240_i32_21 dim 1 : vector<1x256xf32>, i32 -> vector<1x256xf32>
    %cst_22 = arith.constant 0.000000e+00 : f32
    %116 = vector.broadcast %cst_22 : f32 to vector<1x256xf32>
    %117 = arith.select %26, %115, %116 : vector<1x256xi1>, vector<1x256xf32>
    %118 = arith.addf %91, %117 : vector<1x256xf32>
    %119 = arith.negf %118 : vector<1x256xf32>
    %120 = math.exp %119 : vector<1x256xf32>
    %cst_23 = arith.constant 1.000000e+00 : f32
    %121 = vector.broadcast %cst_23 : f32 to vector<1x256xf32>
    %122 = arith.addf %121, %120 : vector<1x256xf32>
    %123 = arith.divf %121, %122 : vector<1x256xf32>
    %c0_24 = arith.constant 0 : index
    %c0_25 = arith.constant 0 : index
    %c0_26 = arith.constant 0 : index
    %124 = vector.load %arg2[%c0_24, %c0_25, %c0_26] : memref<1x4x256xf32, #tpu.memory_space<vmem>>, vector<1x1x256xf32>
    %125 = vector.shape_cast %124 : vector<1x1x256xf32> to vector<1x256xf32>
    %126 = arith.mulf %125, %123 : vector<1x256xf32>
    %c0_27 = arith.constant 0 : index
    %c0_28 = arith.constant 0 : index
    %c0_29 = arith.constant 0 : index
    %127 = vector.load %arg3[%c0_27, %c0_28, %c0_29] : memref<1x4x256xf32, #tpu.memory_space<vmem>>, vector<1x1x256xf32>
    %128 = vector.shape_cast %127 : vector<1x1x256xf32> to vector<1x256xf32>
    %129 = vector.shape_cast %126 : vector<1x256xf32> to vector<1x1x256xf32>
    tpu.vector_store %arg3[%c0_27, %c0_28, %c0_29], %129 {strides = array<i32>} : memref<1x4x256xf32, #tpu.memory_space<vmem>>, vector<1x1x256xf32>,
    %c0_30 = arith.constant 0 : index
    %c1_31 = arith.constant 1 : index
    %c0_32 = arith.constant 0 : index
    %130 = vector.load %arg2[%c0_30, %c1_31, %c0_32] : memref<1x4x256xf32, #tpu.memory_space<vmem>>, vector<1x1x256xf32>
    %131 = vector.shape_cast %130 : vector<1x1x256xf32> to vector<1x256xf32>
    %132 = arith.mulf %131, %123 : vector<1x256xf32>
    %c0_33 = arith.constant 0 : index
    %c1_34 = arith.constant 1 : index
    %c0_35 = arith.constant 0 : index
    %133 = vector.load %arg3[%c0_33, %c1_34, %c0_35] : memref<1x4x256xf32, #tpu.memory_space<vmem>>, vector<1x1x256xf32>
    %134 = vector.shape_cast %133 : vector<1x1x256xf32> to vector<1x256xf32>
    %135 = vector.shape_cast %132 : vector<1x256xf32> to vector<1x1x256xf32>
    tpu.vector_store %arg3[%c0_33, %c1_34, %c0_35], %135 {strides = array<i32>} : memref<1x4x256xf32, #tpu.memory_space<vmem>>, vector<1x1x256xf32>,
    %c0_36 = arith.constant 0 : index
    %c2_37 = arith.constant 2 : index
    %c0_38 = arith.constant 0 : index
    %136 = vector.load %arg2[%c0_36, %c2_37, %c0_38] : memref<1x4x256xf32, #tpu.memory_space<vmem>>, vector<1x1x256xf32>
    %137 = vector.shape_cast %136 : vector<1x1x256xf32> to vector<1x256xf32>
    %138 = arith.mulf %137, %123 : vector<1x256xf32>
    %c0_39 = arith.constant 0 : index
    %c2_40 = arith.constant 2 : index
    %c0_41 = arith.constant 0 : index
    %139 = vector.load %arg3[%c0_39, %c2_40, %c0_41] : memref<1x4x256xf32, #tpu.memory_space<vmem>>, vector<1x1x256xf32>
    %140 = vector.shape_cast %139 : vector<1x1x256xf32> to vector<1x256xf32>
    %141 = vector.shape_cast %138 : vector<1x256xf32> to vector<1x1x256xf32>
    tpu.vector_store %arg3[%c0_39, %c2_40, %c0_41], %141 {strides = array<i32>} : memref<1x4x256xf32, #tpu.memory_space<vmem>>, vector<1x1x256xf32>,
    %c0_42 = arith.constant 0 : index
    %c3_43 = arith.constant 3 : index
    %c0_44 = arith.constant 0 : index
    %142 = vector.load %arg2[%c0_42, %c3_43, %c0_44] : memref<1x4x256xf32, #tpu.memory_space<vmem>>, vector<1x1x256xf32>
    %143 = vector.shape_cast %142 : vector<1x1x256xf32> to vector<1x256xf32>
    %144 = arith.mulf %143, %123 : vector<1x256xf32>
    %c0_45 = arith.constant 0 : index
    %c3_46 = arith.constant 3 : index
    %c0_47 = arith.constant 0 : index
    %145 = vector.load %arg3[%c0_45, %c3_46, %c0_47] : memref<1x4x256xf32, #tpu.memory_space<vmem>>, vector<1x1x256xf32>
    %146 = vector.shape_cast %145 : vector<1x1x256xf32> to vector<1x256xf32>
    %147 = vector.shape_cast %144 : vector<1x256xf32> to vector<1x1x256xf32>
    tpu.vector_store %arg3[%c0_45, %c3_46, %c0_47], %147 {strides = array<i32>} : memref<1x4x256xf32, #tpu.memory_space<vmem>>, vector<1x1x256xf32>,
    return
  }
  func.func @transform_0(%arg0: i32, %arg1: memref<19xf32, #tpu.memory_space<smem>>) -> (i32, i32, i32) {
    %c0_i32 = arith.constant 0 : i32
    %c0_i32_0 = arith.constant 0 : i32
    %c0_i32_1 = arith.constant 0 : i32
    return %arg0, %c0_i32, %c0_i32_0 : i32, i32, i32
  }
  func.func @transform_1(%arg0: i32, %arg1: memref<19xf32, #tpu.memory_space<smem>>) -> (i32, i32, i32) {
    %c0_i32 = arith.constant 0 : i32
    %c0_i32_0 = arith.constant 0 : i32
    %c0_i32_1 = arith.constant 0 : i32
    return %arg0, %c0_i32, %c0_i32_0 : i32, i32, i32
  }
}

</mosaic_0001>

<llo_original>
// kernel: tpu_custom_call.1
$region0: #{tpu_custom_call.1}
  #allocation0 [shape = 'u32[]', space=smem, size = 0x4, offset = 0x4, fixed_abs, tag = 'smem constant byte address 0x4 - core index']
  #allocation1 [shape = 'u32[144,128]{1,0:T(1,128)}', space=vmem, size = 0x12000, scoped, tag = 'internal scratch']
  #allocation2 [shape = 's32[1]{0}', space=sflag, size = 0x4, scoped, tag = 'scoped memory for tpu_custom_call.1']
  #allocation3 [shape = 'u8[512]{0}', space=smem, size = 0x200, scoped, tag = 'prefetched SMEM operand 0']
  %s0 = inlined_call_operand.hbm [shape: f32[19], index: 0, kind: input, shape index: {}]
  %s1 = inlined_call_operand.hbm [shape: f32[2,4,256], index: 1, kind: input, shape index: {}]
  %s2 = inlined_call_operand.hbm [shape: f32[2,4,256], index: 2, kind: output, shape index: {}]
  %s3 = sld [smem:[#allocation0]]
  $region41: #{tpu_custom_call.1} parent=0
    _
  %s5 = ssub.s32 1, %s3
  %s6 = scalar_select 0, %s5, %s3
  %8 = dma.hbm_to_smem %s0, 16, [#allocation3], [#allocation2]
  %9 = dma.done [#allocation2], 16
  %10 = sfence
  $region1: #{tpu_custom_call.1} parent=0
    #allocation4 [shape = 'u8[8192]{0}', space=vmem, size = 0x2000, scoped, tag = 'input window, operand 1']
    #allocation5 [shape = 's32[2]{0}', space=sflag, size = 0x8, scoped, tag = 'scoped memory for tpu_custom_call.1']
    #allocation6 [shape = 's32[2]{0}', space=sflag, size = 0x8, scoped, tag = 'scoped memory for tpu_custom_call.1']
    #allocation7 [shape = 'u8[8192]{0}', space=vmem, size = 0x2000, scoped, tag = 'output window, operand 0']
    %11 = vsyncpa [#allocation5], 0
    %s12 = scalar_lea.sflag [#allocation5], 1
    %13 = vsyncpa %s12, 0
    %14 = vsyncpa [#allocation6], 0
    %s15 = scalar_lea.sflag [#allocation6], 1
    %16 = vsyncpa %s15, 0
    loop: start=0, step=1, limit=4
    $region2: #{tpu_custom_call.1} parent=1 // loop_pre_header
      _
    $region3: #{tpu_custom_call.1} parent=1 // loop_header
      %s18 = sphi 0, %s22
      %p19 = scmp.ge.s32.totalorder %s18, 4
      %s28 = sphi 0, %s30
      %s31 = sphi 0, %s28
      %s32 = sphi 0, %s31
      %s48 = sphi 0, %s32
      %s54 = sphi 0, %s56
      %s57 = sphi 0, %s54
      %s58 = sphi 0, %s57
      %s74 = sphi 0, %s58
    $region4: #{tpu_custom_call.1} parent=1 // loop_header_branch
      %21 = sbr.rel (%p19) target = $region8
    $region5: #{tpu_custom_call.1} parent=1 // loop_body
      %s23 = ssub.s32 %s18, 1
      %s24 = ssub.s32 %s18, 2
      %s25 = sadd.s32 %s18, 1
      %s26 = ssub.s32 %s18, %s25
      %p27 = scmp.eq.s32.totalorder %s26, 0
      %s29 = sadd.s32 %s28, 1
      %s30 = scalar_select %p27, %s28, %s29
      %p33 = pneg %p27
      %p34 = scmp.eq.s32.totalorder %s18, 1
      %p35 = por %p33, %p34
      %p36 = scmp.ne.s32.totalorder %s28, %s31
      %p37 = scmp.eq.s32.totalorder %s18, 0
      %p38 = por %p36, %p37
      %p39 = scmp.ne.s32.totalorder %s28, %s31
      %p40 = scmp.eq.s32.totalorder %s23, 1
      %p41 = por %p39, %p40
      %p42 = scmp.ne.s32.totalorder %s31, %s32
      %p43 = scmp.eq.s32.totalorder %s23, 0
      %p44 = por %p42, %p43
      %p45 = scmp.ne.s32.totalorder %s31, %s32
      %p46 = scmp.eq.s32.totalorder %s24, 1
      %p47 = por %p45, %p46
      %p49 = scmp.ne.s32.totalorder %s32, %s48
      %p50 = scmp.eq.s32.totalorder %s24, 0
      %p51 = por %p49, %p50
      %s52 = ssub.s32 %s18, %s25
      %p53 = scmp.eq.s32.totalorder %s52, 0
      %s55 = sadd.s32 %s54, 1
      %s56 = scalar_select %p53, %s54, %s55
      %p59 = pneg %p53
      %p60 = scmp.eq.s32.totalorder %s18, 1
      %p61 = por %p59, %p60
      %p62 = scmp.ne.s32.totalorder %s54, %s57
      %p63 = scmp.eq.s32.totalorder %s18, 0
      %p64 = por %p62, %p63
      %p65 = scmp.ne.s32.totalorder %s54, %s57
      %p66 = scmp.eq.s32.totalorder %s23, 1
      %p67 = por %p65, %p66
      %p68 = scmp.ne.s32.totalorder %s57, %s58
      %p69 = scmp.eq.s32.totalorder %s23, 0
      %p70 = por %p68, %p69
      %p71 = scmp.ne.s32.totalorder %s57, %s58
      %p72 = scmp.eq.s32.totalorder %s24, 1
      %p73 = por %p71, %p72
      %p75 = scmp.ne.s32.totalorder %s58, %s74
      %p76 = scmp.eq.s32.totalorder %s24, 0
      %p77 = por %p75, %p76
      %p78 = scmp.le.s32.totalorder 1, %s18
      %p79 = scmp.lt.s32.totalorder %s18, 3
      %p80 = pnand %p78, %p79
      %p81 = pneg %p80
      // Predicated region
      $region9: #{tpu_custom_call.1} parent=5 // pred_check
        _
      $region10: #{tpu_custom_call.1} parent=5 // pred_check_branch
        %83 = sbr.rel (%p80) target = $region12
      $region11: #{tpu_custom_call.1} parent=5 // pred_region
        %s84 = ssub.s32 %s18, 1
      $region12: #{tpu_custom_call.1} parent=5 // pred_fallthru
        _
      %p85 = scmp.lt.s32.totalorder %s18, 2
      // Predicated region
      $region13: #{tpu_custom_call.1} parent=5 // pred_check
        %p86 = pneg %p85
      $region14: #{tpu_custom_call.1} parent=5 // pred_check_branch
        %88 = sbr.rel (%p86) target = $region16
      $region15: #{tpu_custom_call.1} parent=5 // pred_region
        // Predicated region
        $region17: #{tpu_custom_call.1} parent=15 // pred_check
          %p89 = pneg %p38
        $region18: #{tpu_custom_call.1} parent=15 // pred_check_branch
          %91 = sbr.rel (%p89) target = $region20
        $region19: #{tpu_custom_call.1} parent=15 // pred_region
          %s92 = sand.u32 %s28, 1
          %s93 = scalar_lea.sflag [#allocation5], %s92
          %s94 = sand.u32 %s28, 1
          %s95 = smul.addr %s94, 8
          %s96 = scalar_lea.vmem [#allocation4], %s95
          %s98 = ssub.s32 128, 128
          %99 = vsyncadd %s93, %s98
          %s100 = smul.addr %s18, 2
          %s101 = smul.addr %s100, 64
          %s102 = scalar_lea.hbm %s1, %s101
          %s104 = sshll.u32 %s96, 4
          %s105 = int_to_ptr.vmem [resolvable:$true] %s104
          %107 = dma.hbm_to_vmem [thread:$0]  %s102, 128, %s105, %s93
        $region20: #{tpu_custom_call.1} parent=15 // pred_fallthru
          _
      $region16: #{tpu_custom_call.1} parent=5 // pred_fallthru
        _
      %p108 = scmp.le.s32.totalorder 1, %s18
      %p109 = scmp.lt.s32.totalorder %s18, 3
      %p110 = pnand %p108, %p109
      %p111 = pneg %p110
      // Predicated region
      $region21: #{tpu_custom_call.1} parent=5 // pred_check
        _
      $region22: #{tpu_custom_call.1} parent=5 // pred_check_branch
        %113 = sbr.rel (%p110) target = $region24
      $region23: #{tpu_custom_call.1} parent=5 // pred_region
        %s114 = ssub.s32 %s18, 1
        %s115 = sand.u32 %s31, 1
        %s116 = scalar_lea.sflag [#allocation5], %s115
        %s117 = sand.u32 %s31, 1
        %s118 = smul.addr %s117, 8
        %s119 = scalar_lea.vmem [#allocation4], %s118
        // Predicated region
        $region25: #{tpu_custom_call.1} parent=23 // pred_check
          %p120 = pneg %p44
        $region26: #{tpu_custom_call.1} parent=23 // pred_check_branch
          %122 = sbr.rel (%p120) target = $region28
        $region27: #{tpu_custom_call.1} parent=23 // pred_region
          %123 = dma.done %s116, 128
        $region28: #{tpu_custom_call.1} parent=23 // pred_fallthru
          _
        %s124 = sand.u32 %s31, 1
        %s125 = scalar_lea.sflag [#allocation5], %s124
        %s126 = sand.u32 %s31, 1
        %s127 = smul.addr %s126, 8
        %s128 = scalar_lea.vmem [#allocation4], %s127
        %p129 = pneg %p44
        %p130 = pneg %p41
        %p131 = pneg %p70
        %p132 = pneg %p67
        %s133 = sand.u32 %s57, 1
        %s134 = scalar_lea.sflag [#allocation6], %s133
        %s135 = sand.u32 %s57, 1
        %s136 = smul.addr %s135, 8
        %s137 = scalar_lea.vmem [#allocation7], %s136
        %v138 = vld [vmem:[%s119] ss:$4 sm:$0x3]
        %s139 = scalar_lea.vmem %s119, 1 [#allocation4]
        %v140 = vld [vmem:[%s139] ss:$4 sm:$0x3]
        %v141 = vmax.f32 %v138, %v140
        %v142 = vadd.f32 %v138, %v140
        %s143 = scalar_lea.vmem %s119, 2 [#allocation4]
        %v144 = vld [vmem:[%s143] ss:$4 sm:$0x3]
        %v145 = vmax.f32 %v141, %v144
        %v146 = vadd.f32 %v142, %v144
        %s147 = scalar_lea.vmem %s119, 3 [#allocation4]
        %v148 = vld [vmem:[%s147] ss:$4 sm:$0x3]
        %v149 = vmax.f32 %v145, %v148
        %v150 = vadd.f32 %v146, %v148
        %v151 = vmul.f32 %v150, 0.25
        %v152 = vlaneseq
        %v153 = vand.u32 %v152, 127
        %v154 = vadd.s32 %v153, 128
        %v155 = vand.u32 %v153, 15
        %v156 = vand.u32 %v154, 15
        %vm157 = vcmp.ge.s32.totalorder %v155, 1
        %vm158 = vcmp.ge.s32.totalorder %v156, 1
        %vm159 = vcmp.le.s32.totalorder %v155, 14
        %vm160 = vcmp.le.s32.totalorder %v156, 14
        %vm161 = vcmp.ge.s32.totalorder %v153, 16
        %vm162 = vcmp.ge.s32.totalorder %v154, 16
        %vm163 = vcmp.lt.s32.totalorder %v153, 240
        %vm164 = vcmp.lt.s32.totalorder %v154, 240
        %v166 = vlaneseq
        %v167 = vshrl.u32 %v166, 7
        %v168 = vsub.s32 0, %v167
        %v169 = vrot.slane %v149, %v168
        %v170 = vlaneseq
        %v171 = vshrl.u32 %v170, 7
        %v172 = vsub.s32 1, %v171
        %v173 = vrot.slane %v149, %v172
        %176 = vrot.lane.b32.xlu0 %v169, 1
        %v177 = vpop.permute.xlu0 %176
        %178 = vrot.lane.b32.xlu0 %v173, 1
        %v179 = vpop.permute.xlu0 %178
        %vm180 = vcmp.lt.s32.totalorder %v153, 1
        %v181 = vsel %vm180, %v177, %v179
        %v182 = vsel %vm180, %v179, %v177
        %v183 = vsel %vm157, %v182, 0.0
        %v184 = vsel %vm158, %v181, 0.0
        %185 = vrot.lane.b32.xlu0 %v169, 127
        %v186 = vpop.permute.xlu0 %185
        %187 = vrot.lane.b32.xlu0 %v173, 127
        %v188 = vpop.permute.xlu0 %187
        %vm189 = vcmp.lt.s32.totalorder %v153, 127
        %v190 = vsel %vm189, %v186, %v188
        %v191 = vsel %vm189, %v188, %v186
        %v192 = vsel %vm159, %v190, 0.0
        %v193 = vsel %vm160, %v191, 0.0
        %v195 = vlaneseq
        %v196 = vshrl.u32 %v195, 7
        %v197 = vsub.s32 0, %v196
        %v198 = vrot.slane %v151, %v197
        %v199 = vlaneseq
        %v200 = vshrl.u32 %v199, 7
        %v201 = vsub.s32 1, %v200
        %v202 = vrot.slane %v151, %v201
        %205 = vrot.lane.b32.xlu0 %v198, 1
        %v206 = vpop.permute.xlu0 %205
        %207 = vrot.lane.b32.xlu0 %v202, 1
        %v208 = vpop.permute.xlu0 %207
        %v209 = vsel %vm180, %v206, %v208
        %v210 = vsel %vm180, %v208, %v206
        %v211 = vsel %vm157, %v210, 0.0
        %v212 = vsel %vm158, %v209, 0.0
        %213 = vrot.lane.b32.xlu0 %v198, 127
        %v214 = vpop.permute.xlu0 %213
        %215 = vrot.lane.b32.xlu0 %v202, 127
        %v216 = vpop.permute.xlu0 %215
        %v217 = vsel %vm189, %v214, %v216
        %v218 = vsel %vm189, %v216, %v214
        %v219 = vsel %vm159, %v217, 0.0
        %v220 = vsel %vm160, %v218, 0.0
        %s221 = sld [smem:[#allocation3 + $0x12]]
        %v222 = vstv %s221
        %s223 = sld [smem:[#allocation3]]
        %v224 = vstv %s223
        %v225 = vmul.f32 %v224, %v183
        %v226 = vmul.f32 %v224, %v184
        %s227 = sld [smem:[#allocation3 + $0x1]]
        %v228 = vstv %s227
        %v229 = vmul.f32 %v228, %v149
        %v231 = vlaneseq
        %v232 = vshrl.u32 %v231, 7
        %v233 = vsub.s32 0, %v232
        %v234 = vrot.slane %v229, %v233
        %v235 = vlaneseq
        %v236 = vshrl.u32 %v235, 7
        %v237 = vsub.s32 1, %v236
        %v238 = vrot.slane %v229, %v237
        %v241 = vadd.f32 %v225, %v234
        %v242 = vadd.f32 %v226, %v238
        %s243 = sld [smem:[#allocation3 + $0x2]]
        %v244 = vstv %s243
        %v245 = vmul.f32 %v244, %v192
        %v246 = vmul.f32 %v244, %v193
        %v247 = vadd.f32 %v241, %v245
        %v248 = vadd.f32 %v242, %v246
        %s249 = sld [smem:[#allocation3 + $0x9]]
        %v250 = vstv %s249
        %v251 = vmul.f32 %v250, %v211
        %v252 = vmul.f32 %v250, %v212
        %v253 = vadd.f32 %v247, %v251
        %v254 = vadd.f32 %v248, %v252
        %s255 = sld [smem:[#allocation3 + $0xa]]
        %v256 = vstv %s255
        %v257 = vmul.f32 %v256, %v151
        %v259 = vlaneseq
        %v260 = vshrl.u32 %v259, 7
        %v261 = vsub.s32 0, %v260
        %v262 = vrot.slane %v257, %v261
        %v263 = vlaneseq
        %v264 = vshrl.u32 %v263, 7
        %v265 = vsub.s32 1, %v264
        %v266 = vrot.slane %v257, %v265
        %v269 = vadd.f32 %v253, %v262
        %v270 = vadd.f32 %v254, %v266
        %s271 = sld [smem:[#allocation3 + $0xb]]
        %v272 = vstv %s271
        %v273 = vmul.f32 %v272, %v219
        %v274 = vmul.f32 %v272, %v220
        %v275 = vadd.f32 %v269, %v273
        %v276 = vadd.f32 %v270, %v274
        %277 = vrot.lane.b32.xlu0 %v275, 16
        %v278 = vpop.permute.xlu0 %277
        %279 = vrot.lane.b32.xlu0 %v276, 16
        %v280 = vpop.permute.xlu0 %279
        %vm281 = vcmp.lt.s32.totalorder %v153, 16
        %v282 = vsel %vm281, %v278, %v280
        %v283 = vsel %vm281, %v280, %v278
        %v284 = vsel %vm161, %v283, 0.0
        %v285 = vsel %vm162, %v282, 0.0
        %v286 = vadd.f32 %v222, %v284
        %v287 = vadd.f32 %v222, %v285
        %s288 = sld [smem:[#allocation3 + $0x3]]
        %v289 = vstv %s288
        %v290 = vmul.f32 %v289, %v183
        %v291 = vmul.f32 %v289, %v184
        %s292 = sld [smem:[#allocation3 + $0x4]]
        %v293 = vstv %s292
        %v294 = vmul.f32 %v293, %v149
        %v296 = vlaneseq
        %v297 = vshrl.u32 %v296, 7
        %v298 = vsub.s32 0, %v297
        %v299 = vrot.slane %v294, %v298
        %v300 = vlaneseq
        %v301 = vshrl.u32 %v300, 7
        %v302 = vsub.s32 1, %v301
        %v303 = vrot.slane %v294, %v302
        %v306 = vadd.f32 %v290, %v299
        %v307 = vadd.f32 %v291, %v303
        %s308 = sld [smem:[#allocation3 + $0x5]]
        %v309 = vstv %s308
        %v310 = vmul.f32 %v309, %v192
        %v311 = vmul.f32 %v309, %v193
        %v312 = vadd.f32 %v306, %v310
        %v313 = vadd.f32 %v307, %v311
        %s314 = sld [smem:[#allocation3 + $0xc]]
        %v315 = vstv %s314
        %v316 = vmul.f32 %v315, %v211
        %v317 = vmul.f32 %v315, %v212
        %v318 = vadd.f32 %v312, %v316
        %v319 = vadd.f32 %v313, %v317
        %s320 = sld [smem:[#allocation3 + $0xd]]
        %v321 = vstv %s320
        %v322 = vmul.f32 %v321, %v151
        %v324 = vlaneseq
        %v325 = vshrl.u32 %v324, 7
        %v326 = vsub.s32 0, %v325
        %v327 = vrot.slane %v322, %v326
        %v328 = vlaneseq
        %v329 = vshrl.u32 %v328, 7
        %v330 = vsub.s32 1, %v329
        %v331 = vrot.slane %v322, %v330
        %v334 = vadd.f32 %v318, %v327
        %v335 = vadd.f32 %v319, %v331
        %s336 = sld [smem:[#allocation3 + $0xe]]
        %v337 = vstv %s336
        %v338 = vmul.f32 %v337, %v219
        %v339 = vmul.f32 %v337, %v220
        %v340 = vadd.f32 %v334, %v338
        %v341 = vadd.f32 %v335, %v339
        %v342 = vadd.f32 %v286, %v340
        %v343 = vadd.f32 %v287, %v341
        %s344 = sld [smem:[#allocation3 + $0x6]]
        %v345 = vstv %s344
        %v346 = vmul.f32 %v345, %v183
        %v347 = vmul.f32 %v345, %v184
        %s348 = sld [smem:[#allocation3 + $0x7]]
        %v349 = vstv %s348
        %v350 = vmul.f32 %v349, %v149
        %v352 = vlaneseq
        %v353 = vshrl.u32 %v352, 7
        %v354 = vsub.s32 0, %v353
        %v355 = vrot.slane %v350, %v354
        %v356 = vlaneseq
        %v357 = vshrl.u32 %v356, 7
        %v358 = vsub.s32 1, %v357
        %v359 = vrot.slane %v350, %v358
        %v362 = vadd.f32 %v346, %v355
        %v363 = vadd.f32 %v347, %v359
        %s364 = sld [smem:[#allocation3 + $0x8]]
        %v365 = vstv %s364
        %v366 = vmul.f32 %v365, %v192
        %v367 = vmul.f32 %v365, %v193
        %v368 = vadd.f32 %v362, %v366
        %v369 = vadd.f32 %v363, %v367
        %s370 = sld [smem:[#allocation3 + $0xf]]
        %v371 = vstv %s370
        %v372 = vmul.f32 %v371, %v211
        %v373 = vmul.f32 %v371, %v212
        %v374 = vadd.f32 %v368, %v372
        %v375 = vadd.f32 %v369, %v373
        %s376 = sld [smem:[#allocation3 + $0x10]]
        %v377 = vstv %s376
        %v378 = vmul.f32 %v377, %v151
        %v380 = vlaneseq
        %v381 = vshrl.u32 %v380, 7
        %v382 = vsub.s32 0, %v381
        %v383 = vrot.slane %v378, %v382
        %v384 = vlaneseq
        %v385 = vshrl.u32 %v384, 7
        %v386 = vsub.s32 1, %v385
        %v387 = vrot.slane %v378, %v386
        %v390 = vadd.f32 %v374, %v383
        %v391 = vadd.f32 %v375, %v387
        %s392 = sld [smem:[#allocation3 + $0x11]]
        %v393 = vstv %s392
        %v394 = vmul.f32 %v393, %v219
        %v395 = vmul.f32 %v393, %v220
        %v396 = vadd.f32 %v390, %v394
        %v397 = vadd.f32 %v391, %v395
        %398 = vrot.lane.b32.xlu0 %v396, 112
        %v399 = vpop.permute.xlu0 %398
        %400 = vrot.lane.b32.xlu0 %v397, 112
        %v401 = vpop.permute.xlu0 %400
        %vm402 = vcmp.lt.s32.totalorder %v153, 112
        %v403 = vsel %vm402, %v399, %v401
        %v404 = vsel %vm402, %v401, %v399
        %v405 = vsel %vm163, %v403, 0.0
        %v406 = vsel %vm164, %v404, 0.0
        %v407 = vadd.f32 %v342, %v405
        %v408 = vadd.f32 %v343, %v406
        %v409 = vxor.u32 %v407, 2147483648
        %v410 = vxor.u32 %v408, 2147483648
        %v411 = vmul.f32 %v409, 1.442695
        %v412 = vpow.pop %v411
        %v413 = vmul.f32 %v410, 1.442695
        %v414 = vpow.pop %v413
        %v415 = vadd.f32 %v412, 1.0
        %v416 = vadd.f32 %v414, 1.0
        %v417 = vrcp.pop %v415
        %v418 = vmul.f32 1.0, %v417
        %v419 = vrcp.pop %v416
        %v420 = vmul.f32 1.0, %v419
        %v423 = vcombine.low %v418, %v420
        %v425 = vunpack.c.l.s4 1966171168
        %v426 = vunpack.c.0.s8 %v425
        %v427 = vlaneseq
        %v428 = vshrl.u32 %v427, 7
        %v429 = vsub.s32 %v426, %v428
        %v430 = vrot.slane %v423, %v429
        %v432 = vunpack.c.l.s4 1966171168
        %v433 = vunpack.c.0.s8 %v432
        %v434 = vlaneseq
        %v435 = vshrl.u32 %v434, 7
        %v436 = vsub.s32 %v433, %v435
        %v437 = vrot.slane %v430, %v436
        %v439 = vmul.f32 %v138, %v437
        %v440 = vlaneseq
        %vm441 = vcmp.ge.s32.totalorder %v440, 0
        %vm442 = vcmp.lt.s32.totalorder %v440, 256
        %vm443 = vmand %vm441, %vm442
        %444 = vst.msk [vmem:[%s137] ss:$4 sm:$0x3] %vm443, %v439
        %v445 = vld [vmem:[%s139] ss:$4 sm:$0x3]
        %v446 = vmul.f32 %v445, %v437
        %s447 = scalar_lea.vmem %s137, 1 [#allocation7]
        %448 = vst.msk [vmem:[%s447] ss:$4 sm:$0x3] %vm443, %v446
        %v449 = vld [vmem:[%s143] ss:$4 sm:$0x3]
        %v450 = vmul.f32 %v449, %v437
        %s451 = scalar_lea.vmem %s137, 2 [#allocation7]
        %452 = vst.msk [vmem:[%s451] ss:$4 sm:$0x3] %vm443, %v450
        %v453 = vld [vmem:[%s147] ss:$4 sm:$0x3]
        %v454 = vmul.f32 %v453, %v437
        %s455 = scalar_lea.vmem %s137, 3 [#allocation7]
        %456 = vst.msk [vmem:[%s455] ss:$4 sm:$0x3] %vm443, %v454
        %s457 = sand.u32 %s57, 1
        %s458 = scalar_lea.sflag [#allocation6], %s457
        %s459 = sand.u32 %s57, 1
        %s460 = smul.addr %s459, 8
        %s461 = scalar_lea.vmem [#allocation7], %s460
        // Predicated region
        $region29: #{tpu_custom_call.1} parent=23 // pred_check
          %p462 = pneg %p67
        $region30: #{tpu_custom_call.1} parent=23 // pred_check_branch
          %464 = sbr.rel (%p462) target = $region32
        $region31: #{tpu_custom_call.1} parent=23 // pred_region
          %s466 = ssub.s32 128, 128
          %467 = vsyncadd %s458, %s466
          %s468 = smul.addr %s23, 2
          %s469 = smul.addr %s468, 64
          %s470 = scalar_lea.hbm %s2, %s469
          %s472 = sshll.u32 %s461, 4
          %s473 = int_to_ptr.vmem [resolvable:$true] %s472
          %475 = dma.vmem_to_hbm [thread:$0]  %s473, 128, %s470, %s458
        $region32: #{tpu_custom_call.1} parent=23 // pred_fallthru
          _
      $region24: #{tpu_custom_call.1} parent=5 // pred_fallthru
        _
      %p476 = scmp.le.s32.totalorder 2, %s18
      // Predicated region
      $region33: #{tpu_custom_call.1} parent=5 // pred_check
        %p477 = pneg %p476
      $region34: #{tpu_custom_call.1} parent=5 // pred_check_branch
        %479 = sbr.rel (%p477) target = $region36
      $region35: #{tpu_custom_call.1} parent=5 // pred_region
        %s480 = ssub.s32 %s18, 2
        // Predicated region
        $region37: #{tpu_custom_call.1} parent=35 // pred_check
          %p481 = pneg %p73
        $region38: #{tpu_custom_call.1} parent=35 // pred_check_branch
          %483 = sbr.rel (%p481) target = $region40
        $region39: #{tpu_custom_call.1} parent=35 // pred_region
          %s484 = sand.u32 %s58, 1
          %s485 = scalar_lea.sflag [#allocation6], %s484
          %s486 = sand.u32 %s58, 1
          %s487 = smul.addr %s486, 8
          %s488 = scalar_lea.vmem [#allocation7], %s487
          %489 = dma.done %s485, 128
        $region40: #{tpu_custom_call.1} parent=35 // pred_fallthru
          _
      $region36: #{tpu_custom_call.1} parent=5 // pred_fallthru
        _
    $region6: #{tpu_custom_call.1} parent=1 // loop_footer
      %s22 = sadd.s32 1, %s18
    $region7: #{tpu_custom_call.1} parent=1 // loop_footer_branch
      %17 = sbr.rel target = $region3
    $region8: #{tpu_custom_call.1} parent=1 // loop_exit
      _
    %490 = vsyncpa [#allocation5], 1
    %s491 = scalar_lea.sflag [#allocation5], 1
    %492 = vsyncpa %s491, 1
    %493 = vsyncpa [#allocation6], 1
    %s494 = scalar_lea.sflag [#allocation6], 1
    %495 = vsyncpa %s494, 1

</llo_original>
